<compile_context>
chip_gen: v6e
topology: v6e:2x2x1
jax: 0.10.0
libtpu: 0.0.40
codegen_flags: <defaults>
</compile_context>

<pallas_src>
import functools

import jax
import jax.numpy as jnp
from jax.experimental import pallas as pl
from jax.experimental.pallas import tpu as pltpu

_LANES = 128           # vreg lane width: last dim must be lane-dense
_MAX_TILE_ROWS = 4096  # 4096 x 128 f32 = 2 MiB/tile; 8 MiB live double-buffered


def _round_up(x, m):
    return ((x + m - 1) // m) * m


def _regression_kernel(w_ref, b_ref, x_ref, o_ref):
    # w_ref / b_ref are (1,) f32 scalars in SMEM; x_ref / o_ref are
    # (tile_rows, 128) VMEM tiles. Scalar reads hoisted once per grid step.
    w = w_ref[0]
    b = b_ref[0]
    y = x_ref[...].astype(jnp.float32) * w + b
    o_ref[...] = y.astype(o_ref.dtype)


def _regression_forward_impl(x, weight, bias):
    """y = x @ weight.T + bias for a Linear(1, 1) layer.

    x:      (N, 1)  (PyTorch (batch, in_features) convention)
    weight: (1, 1)  (PyTorch nn.Linear weight shape: (out, in))
    bias:   (1,)
    returns (N, 1), same dtype as x
    """
    n = x.shape[0]
    out_dtype = x.dtype
    w_scalar = weight.reshape((1,)).astype(jnp.float32)
    b_scalar = bias.reshape((1,)).astype(jnp.float32)

    # Flatten (in_features == 1) and view as a lane-dense (rows, 128) slab.
    x_flat = x.reshape((-1,))
    rows_needed = max(1, -(-n // _LANES))
    if rows_needed >= _MAX_TILE_ROWS:
        tile_rows = _MAX_TILE_ROWS
    else:
        # (8, 128) divisibility rule for the block shape.
        tile_rows = _round_up(rows_needed, 8)
    rows_padded = _round_up(rows_needed, tile_rows)
    total_padded = rows_padded * _LANES

    pad = total_padded - n
    if pad:
        # Only taken for ragged N; under jit this fuses with the kernel's
        # input DMA rather than being a standalone HBM copy.
        x_flat = jnp.pad(x_flat, (0, pad))
    x2d = x_flat.reshape((rows_padded, _LANES))

    grid = rows_padded // tile_rows

    y2d = pl.pallas_call(
        _regression_kernel,
        out_shape=jax.ShapeDtypeStruct((rows_padded, _LANES), out_dtype),
        grid=(grid,),
        in_specs=[
            pl.BlockSpec(memory_space=pltpu.MemorySpace.SMEM),    # weight scalar
            pl.BlockSpec(memory_space=pltpu.MemorySpace.SMEM),    # bias scalar
            pl.BlockSpec((tile_rows, _LANES), lambda i: (i, 0)),  # x tile
        ],
        out_specs=pl.BlockSpec((tile_rows, _LANES), lambda i: (i, 0)),
        compiler_params=pltpu.CompilerParams(
            dimension_semantics=("parallel",),
            vmem_limit_bytes=32 * 1024 * 1024,
        ),
    )(w_scalar, b_scalar, x2d)

    # Slice padded tail off and restore the (N, 1) shape (fuses under jit).
    return y2d.reshape((-1,))[:n].reshape((n, 1))


regression_forward = jax.jit(_regression_forward_impl)


if __name__ == "__main__":
    key = jax.random.PRNGKey(0)
    kx, kw, kb = jax.random.split(key, 3)

    # Small deterministic inputs / parameters (shapes implied by Linear(1, 1)).
    N = 8
    x = jax.random.normal(kx, (N, 1), dtype=jnp.float32)
    weight = jax.random.normal(kw, (1, 1), dtype=jnp.float32)
    bias = jax.random.normal(kb, (1,), dtype=jnp.float32)

    y = regression_forward(x, weight, bias)
    y = jax.block_until_ready(y)

    y_ref = x @ weight.T + bias
    assert y.shape == (N, 1)
    assert y.dtype == x.dtype
    assert jnp.allclose(y, y_ref, atol=1e-6), "mismatch vs reference (small)"

    # Second check: exact multiple of the 4096x128 tile -> 2 grid steps, no pad.
    N2 = 2 * _MAX_TILE_ROWS * _LANES  # 1,048,576 elements
    x2 = jax.random.normal(kx, (N2, 1), dtype=jnp.float32)
    y2 = jax.block_until_ready(regression_forward(x2, weight, bias))
    y2_ref = x2 @ weight.T + bias
    assert y2.shape == (N2, 1)
    assert jnp.allclose(y2, y2_ref, atol=1e-6), "mismatch vs reference (tiled)"

    # Third check: ragged N exercising the pad + partial-tail path.
    N3 = 200_003
    x3 = jax.random.normal(kb, (N3, 1), dtype=jnp.float32)
    y3 = jax.block_until_ready(regression_forward(x3, weight, bias))
    y3_ref = x3 @ weight.T + bias
    assert y3.shape == (N3, 1)
    assert jnp.allclose(y3, y3_ref, atol=1e-6), "mismatch vs reference (ragged)"

    print("KERNEL_OK")
</pallas_src>

<mosaic_0001>
module attributes {stable_mosaic.version = 11 : i64} {
  func.func @_regression_kernel(%arg0: i32, %arg1: memref<1xf32, #tpu.memory_space<smem>>, %arg2: memref<1xf32, #tpu.memory_space<smem>>, %arg3: memref<8x128xf32, #tpu.memory_space<vmem>>, %arg4: memref<8x128xf32, #tpu.memory_space<vmem>>) attributes {dimension_semantics = [#tpu.dimension_semantics<parallel>], iteration_bounds = array<i64: 1>, scalar_prefetch = 0 : i64, scratch_operands = 0 : i64, tpu.core_type = #tpu.core_type<tc>, window_params = [{transform_indices = @transform_0, window_bounds = array<i64: 1>}, {transform_indices = @transform_1, window_bounds = array<i64: 1>}, {transform_indices = @transform_2, window_bounds = array<i64: 8, 128>}, {transform_indices = @transform_3, window_bounds = array<i64: 8, 128>}]} {
    %c0 = arith.constant 0 : index
    %0 = memref.load %arg1[%c0] : memref<1xf32, #tpu.memory_space<smem>>
    %c0_0 = arith.constant 0 : index
    %1 = memref.load %arg2[%c0_0] : memref<1xf32, #tpu.memory_space<smem>>
    %c0_1 = arith.constant 0 : index
    %c0_2 = arith.constant 0 : index
    %2 = vector.load %arg3[%c0_1, %c0_2] : memref<8x128xf32, #tpu.memory_space<vmem>>, vector<8x128xf32>
    %3 = vector.broadcast %0 : f32 to vector<8x128xf32>
    %4 = arith.mulf %2, %3 : vector<8x128xf32>
    %5 = vector.broadcast %1 : f32 to vector<8x128xf32>
    %6 = arith.addf %4, %5 : vector<8x128xf32>
    %c0_3 = arith.constant 0 : index
    %c0_4 = arith.constant 0 : index
    %7 = vector.load %arg4[%c0_3, %c0_4] : memref<8x128xf32, #tpu.memory_space<vmem>>, vector<8x128xf32>
    tpu.vector_store %arg4[%c0_3, %c0_4], %6 {strides = array<i32>} : memref<8x128xf32, #tpu.memory_space<vmem>>, vector<8x128xf32>,
    return
  }
  func.func @transform_0(%arg0: i32) -> i32 {
    %c0_i32 = arith.constant 0 : i32
    %c0_i32_0 = arith.constant 0 : i32
    return %c0_i32 : i32
  }
  func.func @transform_1(%arg0: i32) -> i32 {
    %c0_i32 = arith.constant 0 : i32
    %c0_i32_0 = arith.constant 0 : i32
    return %c0_i32 : i32
  }
  func.func @transform_2(%arg0: i32) -> (i32, i32) {
    %c0_i32 = arith.constant 0 : i32
    %c0_i32_0 = arith.constant 0 : i32
    return %arg0, %c0_i32 : i32, i32
  }
  func.func @transform_3(%arg0: i32) -> (i32, i32) {
    %c0_i32 = arith.constant 0 : i32
    %c0_i32_0 = arith.constant 0 : i32
    return %arg0, %c0_i32 : i32, i32
  }
}

</mosaic_0001>

<llo_original>
// kernel: _regression_forward_impl.1
$region0: #{_regression_forward_impl.1}
  #allocation0 [shape = 'u32[]', space=smem, size = 0x4, offset = 0x4, fixed_abs, tag = 'smem constant byte address 0x4 - core index']
  #allocation1 [shape = 'u32[144,128]{1,0:T(1,128)}', space=vmem, size = 0x12000, scoped, tag = 'internal scratch']
  #allocation2 [shape = 'f32[1]{0:T(128)S(6)}', space=smem, size = 0x200, scoped, tag = 'scoped memory for _regression_forward_impl.1']
  #allocation3 [shape = 'f32[1]{0:T(128)S(6)}', space=smem, size = 0x200, scoped, tag = 'scoped memory for _regression_forward_impl.1']
  %s0 = inlined_call_operand.<no memory space> [shape: f32[1], index: 0, kind: input, shape index: {}]
  %s1 = inlined_call_operand.<no memory space> [shape: f32[1], index: 1, kind: input, shape index: {}]
  %s2 = inlined_call_operand.vmem [shape: f32[8,128], index: 2, kind: input, shape index: {}]
  %s3 = inlined_call_operand.vmem [shape: f32[8,128], index: 3, kind: output, shape index: {}]
  %s4 = sld [smem:[#allocation0]]
  $region22: #{_regression_forward_impl.1} parent=0
    _
  %s6 = ssub.s32 1, %s4
  %s7 = scalar_select 0, %s6, %s4
  %8 = sst [smem:[#allocation2]] %s0
  %9 = sst [smem:[#allocation3]] %s1
  // Predicated region
  $region2: #{_regression_forward_impl.1} parent=0 // pred_check
    _
  $region3: #{_regression_forward_impl.1} parent=0 // pred_check_branch
    %11 = sbr.rel (0) target = $region5
  $region4: #{_regression_forward_impl.1} parent=0 // pred_region
    _
  $region5: #{_regression_forward_impl.1} parent=0 // pred_fallthru
    _
  // Predicated region
  $region6: #{_regression_forward_impl.1} parent=0 // pred_check
    _
  $region7: #{_regression_forward_impl.1} parent=0 // pred_check_branch
    %13 = sbr.rel (0) target = $region9
  $region8: #{_regression_forward_impl.1} parent=0 // pred_region
    _
  $region9: #{_regression_forward_impl.1} parent=0 // pred_fallthru
    _
  // Predicated region
  $region10: #{_regression_forward_impl.1} parent=0 // pred_check
    _
  $region11: #{_regression_forward_impl.1} parent=0 // pred_check_branch
    %15 = sbr.rel (0) target = $region13
  $region12: #{_regression_forward_impl.1} parent=0 // pred_region
    _
  $region13: #{_regression_forward_impl.1} parent=0 // pred_fallthru
    _
  %s16 = sld [smem:[#allocation2]]
  %s17 = sld [smem:[#allocation3]]
  %v18 = vld [vmem:[%s2] sm:$0xff]
  %v19 = vstv %s16
  %v20 = vmul.f32 %v18, %v19
  %v21 = vstv %s17
  %v22 = vadd.f32 %v20, %v21
  %23 = vst [vmem:[%s3] sm:$0xff] %v22
  // Predicated region
  $region14: #{_regression_forward_impl.1} parent=0 // pred_check
    _
  $region15: #{_regression_forward_impl.1} parent=0 // pred_check_branch
    %25 = sbr.rel (0) target = $region17
  $region16: #{_regression_forward_impl.1} parent=0 // pred_region
    _
  $region17: #{_regression_forward_impl.1} parent=0 // pred_fallthru
    _
  // Predicated region
  $region18: #{_regression_forward_impl.1} parent=0 // pred_check
    _
  $region19: #{_regression_forward_impl.1} parent=0 // pred_check_branch
    %27 = sbr.rel (0) target = $region21
  $region20: #{_regression_forward_impl.1} parent=0 // pred_region
    _
  $region21: #{_regression_forward_impl.1} parent=0 // pred_fallthru
    _

</llo_original>
